<compile_context>
chip_gen: v6e
topology: v6e:2x2x1
jax: 0.10.0
libtpu: 0.0.40
codegen_flags: <defaults>
</compile_context>

<pallas_src>
import math

import jax
import jax.numpy as jnp
from jax.experimental import pallas as pl
from jax.experimental.pallas import tpu as pltpu

_GELU_C = math.sqrt(2.0 / math.pi)
_F32 = 4   # bytes / f32
_WGT = 2   # bytes / bf16 weight element


def _round_up(n, m):
    return ((n + m - 1) // m) * m


def _align_down(n, m):
    return (n // m) * m


# ---------------------------------------------------------------------------
# Kernel
# ---------------------------------------------------------------------------
def _ffn_kernel(x_ref, w1a_ref, w1g_ref, w2_ref, o_ref, *scratch):
    """One row-tile of the fused FFN.

    No scratch  -> resident-weight path (single hidden chunk, write output).
    acc scratch -> hidden-dim-tiled path (grid axis 1 walks hidden chunks).
    """
    x = x_ref[...].astype(w1g_ref.dtype)                                   # (tm, Dp) bf16
    # Gate matmul first so its EUP/VPU tail overlaps the value matmul on the MXU.
    g = jnp.dot(x, w1g_ref[...], preferred_element_type=jnp.float32)       # (tm, th) f32
    gelu = 0.5 * g * (1.0 + jnp.tanh(_GELU_C * (g + 0.044715 * (g * g * g))))
    a = jnp.dot(x, w1a_ref[...], preferred_element_type=jnp.float32)       # (tm, th) f32
    y = (a * gelu).astype(w2_ref.dtype)                                    # (tm, th) bf16
    partial = jnp.dot(y, w2_ref[...], preferred_element_type=jnp.float32)  # (tm, Dp) f32

    if not scratch:
        o_ref[...] = partial.astype(o_ref.dtype)
    else:
        (acc_ref,) = scratch
        k = pl.program_id(1)

        @pl.when(k == 0)
        def _():
            acc_ref[...] = jnp.zeros_like(acc_ref)

        acc_ref[...] += partial

        @pl.when(k == pl.num_programs(1) - 1)
        def _():
            o_ref[...] = acc_ref[...].astype(o_ref.dtype)


# ---------------------------------------------------------------------------
# Parameter prep (done once, outside the per-call path)
# ---------------------------------------------------------------------------
def prepare_ffn_params(w1, w2, dtype=jnp.bfloat16):
    """Pack weights lane-dense, pre-transposed, value/gate split, bf16.

    w1: (d_inner, d_model)      -- torch nn.Linear weight layout (out, in)
    w2: (d_model, d_inner // 2) -- torch nn.Linear weight layout (out, in)
    """
    d_inner, d_model = w1.shape
    d_hidden = d_inner // 2
    assert w2.shape == (d_model, d_hidden)

    dp = _round_up(d_model, 128)   # lane-dense input/output feature dim
    hp = _round_up(d_hidden, 128)  # lane-dense hidden half width

    # Zero padding preserves semantics: gelu(0)=0, zero W2 rows contribute 0.
    w1a_t = jnp.zeros((dp, hp), dtype).at[:d_model, :d_hidden].set(
        w1[:d_hidden].T.astype(dtype))          # value half, (Dp, Hp)
    w1g_t = jnp.zeros((dp, hp), dtype).at[:d_model, :d_hidden].set(
        w1[d_hidden:].T.astype(dtype))          # gate half,  (Dp, Hp)
    w2_t = jnp.zeros((hp, dp), dtype).at[:d_hidden, :d_model].set(
        w2.T.astype(dtype))                     # (Hp, Dp)

    return {"w1a_t": w1a_t, "w1g_t": w1g_t, "w2t": w2_t,
            "d_model": d_model, "d_hidden": d_hidden, "Dp": dp, "Hp": hp}


# ---------------------------------------------------------------------------
# VMEM accounting / hardware query
# ---------------------------------------------------------------------------
def _act_vmem_bytes(tm, dp, th, tiled):
    b = 2 * tm * dp * _F32          # x tile (double buffered, f32)
    b += 2 * tm * dp * _F32         # out tile (double buffered, f32)
    if tiled:
        b += tm * dp * _F32         # f32 accumulator scratch
    b += 4 * tm * th * _F32         # g / gelu / a / y temporaries (generous)
    return b


def _weight_vmem_bytes(dp, th, tiled):
    # resident path: single copy (untiled VMEM operands);
    # tiled path: streamed chunks, double buffered.
    nbuf = 2 if tiled else 1
    return nbuf * 3 * dp * th * _WGT


def _tpu_vmem_capacity_bytes():
    try:
        return int(pltpu.get_tpu_info().vmem_capacity_bytes)
    except Exception:
        return 128 * 1024 * 1024    # v5e/v6e default


# ---------------------------------------------------------------------------
# Wrapper
# ---------------------------------------------------------------------------
def feed_forward(x, params, *, vmem_budget_bytes=None, force_hidden_tile=None):
    """x: (B, S, d_model) -> (B, S, d_model)."""
    B, S, D = x.shape
    assert D == params["d_model"]
    dp, hp = params["Dp"], params["Hp"]
    d_hidden = params["d_hidden"]
    w1a_t, w1g_t, w2_t = params["w1a_t"], params["w1g_t"], params["w2t"]

    rows = B * S

    vmem_cap = _tpu_vmem_capacity_bytes()
    # Leave ~25% headroom for compiler scratch / semaphores.
    budget = (vmem_budget_bytes if vmem_budget_bytes is not None
              else vmem_cap - vmem_cap // 4)
    is_megacore = vmem_cap <= 80 * 1024 * 1024     # v7x-class: 64 MiB VMEM, 2 TCs

    # ---- hidden-chunk (reduction) size ------------------------------------
    rows16 = _round_up(rows, 16)     # bf16 sublane packing -> tm multiple of 16
    tm_min = min(rows16, 256)
    if force_hidden_tile is not None:
        th = int(force_hidden_tile)
        assert hp % th == 0 and th % 128 == 0
    else:
        th = 128
        for cand in (hp, 2048, 1024, 512, 256, 128):
            if cand > hp or hp % cand:
                continue
            tiled_c = cand != hp
            if (_weight_vmem_bytes(dp, cand, tiled_c)
                    + _act_vmem_bytes(tm_min, dp, cand, tiled_c)) <= budget:
                th = cand
                break
    tiled = th != hp
    nk = hp // th

    # ---- row tile: largest aligned tile that fits the remaining budget ----
    per_row = (4 * dp + (dp if tiled else 0) + 4 * th) * _F32
    budget_left = max(budget - _weight_vmem_bytes(dp, th, tiled), per_row * 16)
    tm = max(budget_left // per_row, 16)
    tm = min(tm, rows16, 2048)
    if is_megacore and rows16 >= 32:
        # keep >= 2 row tiles so both v7x TensorCores get work
        tm = min(tm, _round_up(pl.cdiv(rows, 2), 16))
    if tm >= 256:
        tm = _align_down(tm, 256)
    elif tm >= 128:
        tm = 128
    else:
        tm = max(_align_down(tm, 16), 16)

    ni = pl.cdiv(rows, tm)           # ragged last tile handled by Pallas masking

    # ---- lane-dense features (pad only if d_model % 128 != 0) -------------
    x2 = x.reshape(rows, D)
    if dp != D:
        x2 = jnp.pad(x2, ((0, 0), (0, dp - D)))

    cost = pl.CostEstimate(
        flops=6 * rows * D * d_hidden,
        transcendentals=rows * d_hidden,
        bytes_accessed=rows * dp * _F32 * 2 + 3 * dp * hp * _WGT,
    )

    need = _weight_vmem_bytes(dp, th, tiled) + _act_vmem_bytes(tm, dp, th, tiled)
    vmem_limit = int(min(max(int(1.25 * need) + (2 << 20), 32 << 20),
                         vmem_cap - vmem_cap // 8))

    if not tiled:
        # Resident-weight path: weights live whole in VMEM, single copy.
        grid = (ni,)
        in_specs = [
            pl.BlockSpec((tm, dp), lambda i: (i, 0)),                  # x rows
            pl.BlockSpec(memory_space=pltpu.MemorySpace.VMEM),         # W1 value half
            pl.BlockSpec(memory_space=pltpu.MemorySpace.VMEM),         # W1 gate half
            pl.BlockSpec(memory_space=pltpu.MemorySpace.VMEM),         # W2
        ]
        out_specs = pl.BlockSpec((tm, dp), lambda i: (i, 0))
        scratch_shapes = []
        dim_sem = ("parallel",)
    else:
        # Hidden-dim-tiled reduction path (VMEM capped independent of d_inner).
        grid = (ni, nk)
        in_specs = [
            pl.BlockSpec((tm, dp), lambda i, k: (i, 0)),               # x rows (k-invariant)
            pl.BlockSpec((dp, th), lambda i, k: (0, k)),               # W1 value chunk
            pl.BlockSpec((dp, th), lambda i, k: (0, k)),               # W1 gate chunk
            pl.BlockSpec((th, dp), lambda i, k: (k, 0)),               # W2 chunk
        ]
        out_specs = pl.BlockSpec((tm, dp), lambda i, k: (i, 0))
        scratch_shapes = [pltpu.VMEM((tm, dp), jnp.float32)]
        dim_sem = ("parallel", "arbitrary")

    out2 = pl.pallas_call(
        _ffn_kernel,
        out_shape=jax.ShapeDtypeStruct((rows, dp), x.dtype),
        grid=grid,
        in_specs=in_specs,
        out_specs=out_specs,
        scratch_shapes=scratch_shapes,
        compiler_params=pltpu.CompilerParams(
            dimension_semantics=dim_sem,
            vmem_limit_bytes=vmem_limit,
        ),
        cost_estimate=cost,
    )(x2, w1a_t, w1g_t, w2_t)

    if dp != D:
        out2 = out2[:, :D]
    return out2.reshape(B, S, D)


# ---------------------------------------------------------------------------
# Main
# ---------------------------------------------------------------------------
if __name__ == "__main__":
    key = jax.random.PRNGKey(0)

    def ref_ffn(x, w1, w2, d_hidden):
        # Pure-JAX reference of the PyTorch forward, with the same bf16 rounding
        # of the matmul operands the kernel applies (accumulation stays f32).
        xb = x.astype(jnp.bfloat16).astype(jnp.float32)
        w1b = w1.astype(jnp.bfloat16).astype(jnp.float32)
        w2b = w2.astype(jnp.bfloat16).astype(jnp.float32)
        h = xb @ w1b.T
        a, g = h[..., :d_hidden], h[..., d_hidden:]
        gelu = 0.5 * g * (1.0 + jnp.tanh(_GELU_C * (g + 0.044715 * g ** 3)))
        y = (a * gelu).astype(jnp.bfloat16).astype(jnp.float32)
        return y @ w2b.T

    def run_case(case_key, B, S, d_model, d_inner, force_hidden_tile=None):
        d_hidden = d_inner // 2
        k_x, k_w1, k_w2 = jax.random.split(case_key, 3)
        x = jax.random.normal(k_x, (B, S, d_model), dtype=jnp.float32)
        b1 = 1.0 / math.sqrt(d_model)
        w1 = jax.random.uniform(k_w1, (d_inner, d_model), jnp.float32, -b1, b1)
        b2 = 1.0 / math.sqrt(d_hidden)
        w2 = jax.random.uniform(k_w2, (d_model, d_hidden), jnp.float32, -b2, b2)

        params = prepare_ffn_params(w1, w2)
        out = jax.block_until_ready(
            feed_forward(x, params, force_hidden_tile=force_hidden_tile))
        ref = ref_ffn(x, w1, w2, d_hidden)
        assert out.shape == (B, S, d_model)
        err = float(jnp.max(jnp.abs(out - ref)))
        assert jnp.allclose(out, ref, atol=5e-3, rtol=5e-3), \
            f"FeedForward mismatch: max |err| = {err}"
        return out

    k1, k2 = jax.random.split(key)
    # Resident-weight path (weights fully VMEM-resident, single copy).
    run_case(k1, B=2, S=8, d_model=32, d_inner=128)
    # Hidden-dim-tiled reduction path (forced 128-wide hidden chunks -> 2 steps).
    run_case(k2, B=2, S=8, d_model=32, d_inner=512, force_hidden_tile=128)

    print("KERNEL_OK")
</pallas_src>

<mosaic_0001>
module attributes {stable_mosaic.version = 11 : i64} {
  func.func @_ffn_kernel(%arg0: i32, %arg1: memref<16x128xf32, #tpu.memory_space<vmem>>, %arg2: memref<128x128xbf16, #tpu.memory_space<vmem>>, %arg3: memref<128x128xbf16, #tpu.memory_space<vmem>>, %arg4: memref<128x128xbf16, #tpu.memory_space<vmem>>, %arg5: memref<16x128xf32, #tpu.memory_space<vmem>>) attributes {dimension_semantics = [#tpu.dimension_semantics<parallel>], iteration_bounds = array<i64: 1>, scalar_prefetch = 0 : i64, scratch_operands = 0 : i64, tpu.core_type = #tpu.core_type<tc>, window_params = [{transform_indices = @transform_0, window_bounds = array<i64: 16, 128>}, {pipeline_mode = #tpu.pipeline_mode<synchronous>, transform_indices = @transform_1, window_bounds = array<i64: 128, 128>}, {pipeline_mode = #tpu.pipeline_mode<synchronous>, transform_indices = @transform_2, window_bounds = array<i64: 128, 128>}, {pipeline_mode = #tpu.pipeline_mode<synchronous>, transform_indices = @transform_3, window_bounds = array<i64: 128, 128>}, {transform_indices = @transform_4, window_bounds = array<i64: 16, 128>}]} {
    %c0 = arith.constant 0 : index
    %c0_0 = arith.constant 0 : index
    %0 = vector.load %arg1[%c0, %c0_0] : memref<16x128xf32, #tpu.memory_space<vmem>>, vector<16x128xf32>
    %1 = arith.truncf %0 : vector<16x128xf32> to vector<16x128xbf16>
    %c0_1 = arith.constant 0 : index
    %c0_2 = arith.constant 0 : index
    %2 = vector.load %arg3[%c0_1, %c0_2] : memref<128x128xbf16, #tpu.memory_space<vmem>>, vector<128x128xbf16>
    %cst = arith.constant dense<0.000000e+00> : vector<16x128xf32>
    %3 = tpu.matmul %1, %2, %cst {dimension_numbers = #tpu.dot_dimension_numbers<[1], [0], [0], [1], [0, 0, 1, 1], [], []>} : vector<16x128xbf16>, vector<128x128xbf16>, vector<16x128xf32> -> vector<16x128xf32>
    %cst_3 = arith.constant 5.000000e-01 : f32
    %4 = vector.broadcast %cst_3 : f32 to vector<16x128xf32>
    %5 = arith.mulf %4, %3 : vector<16x128xf32>
    %6 = arith.mulf %3, %3 : vector<16x128xf32>
    %7 = arith.mulf %6, %3 : vector<16x128xf32>
    %cst_4 = arith.constant 4.471500e-02 : f32
    %8 = vector.broadcast %cst_4 : f32 to vector<16x128xf32>
    %9 = arith.mulf %8, %7 : vector<16x128xf32>
    %10 = arith.addf %3, %9 : vector<16x128xf32>
    %cst_5 = arith.constant 0.797884583 : f32
    %11 = vector.broadcast %cst_5 : f32 to vector<16x128xf32>
    %12 = arith.mulf %11, %10 : vector<16x128xf32>
    %13 = math.tanh %12 : vector<16x128xf32>
    %cst_6 = arith.constant 1.000000e+00 : f32
    %14 = vector.broadcast %cst_6 : f32 to vector<16x128xf32>
    %15 = arith.addf %14, %13 : vector<16x128xf32>
    %16 = arith.mulf %5, %15 : vector<16x128xf32>
    %c0_7 = arith.constant 0 : index
    %c0_8 = arith.constant 0 : index
    %17 = vector.load %arg2[%c0_7, %c0_8] : memref<128x128xbf16, #tpu.memory_space<vmem>>, vector<128x128xbf16>
    %cst_9 = arith.constant dense<0.000000e+00> : vector<16x128xf32>
    %18 = tpu.matmul %1, %17, %cst_9 {dimension_numbers = #tpu.dot_dimension_numbers<[1], [0], [0], [1], [0, 0, 1, 1], [], []>} : vector<16x128xbf16>, vector<128x128xbf16>, vector<16x128xf32> -> vector<16x128xf32>
    %19 = arith.mulf %18, %16 : vector<16x128xf32>
    %20 = arith.truncf %19 : vector<16x128xf32> to vector<16x128xbf16>
    %c0_10 = arith.constant 0 : index
    %c0_11 = arith.constant 0 : index
    %21 = vector.load %arg4[%c0_10, %c0_11] : memref<128x128xbf16, #tpu.memory_space<vmem>>, vector<128x128xbf16>
    %cst_12 = arith.constant dense<0.000000e+00> : vector<16x128xf32>
    %22 = tpu.matmul %20, %21, %cst_12 {dimension_numbers = #tpu.dot_dimension_numbers<[1], [0], [0], [1], [0, 0, 1, 1], [], []>} : vector<16x128xbf16>, vector<128x128xbf16>, vector<16x128xf32> -> vector<16x128xf32>
    %c0_13 = arith.constant 0 : index
    %c0_14 = arith.constant 0 : index
    %23 = vector.load %arg5[%c0_13, %c0_14] : memref<16x128xf32, #tpu.memory_space<vmem>>, vector<16x128xf32>
    tpu.vector_store %arg5[%c0_13, %c0_14], %22 {strides = array<i32>} : memref<16x128xf32, #tpu.memory_space<vmem>>, vector<16x128xf32>,
    return
  }
  func.func @transform_0(%arg0: i32) -> (i32, i32) {
    %c0_i32 = arith.constant 0 : i32
    %c0_i32_0 = arith.constant 0 : i32
    return %arg0, %c0_i32 : i32, i32
  }
  func.func @transform_1(%arg0: i32) -> (i32, i32) {
    %c0_i32 = arith.constant 0 : i32
    %c0_i32_0 = arith.constant 0 : i32
    %c0_i32_1 = arith.constant 0 : i32
    return %c0_i32, %c0_i32_0 : i32, i32
  }
  func.func @transform_2(%arg0: i32) -> (i32, i32) {
    %c0_i32 = arith.constant 0 : i32
    %c0_i32_0 = arith.constant 0 : i32
    %c0_i32_1 = arith.constant 0 : i32
    return %c0_i32, %c0_i32_0 : i32, i32
  }
  func.func @transform_3(%arg0: i32) -> (i32, i32) {
    %c0_i32 = arith.constant 0 : i32
    %c0_i32_0 = arith.constant 0 : i32
    %c0_i32_1 = arith.constant 0 : i32
    return %c0_i32, %c0_i32_0 : i32, i32
  }
  func.func @transform_4(%arg0: i32) -> (i32, i32) {
    %c0_i32 = arith.constant 0 : i32
    %c0_i32_0 = arith.constant 0 : i32
    return %arg0, %c0_i32 : i32, i32
  }
}

</mosaic_0001>

<llo_original>
// kernel: tpu_custom_call.1
$region0: #{tpu_custom_call.1}
  #allocation0 [shape = 'u32[]', space=smem, size = 0x4, offset = 0x4, fixed_abs, tag = 'smem constant byte address 0x4 - core index']
  #allocation1 [shape = 'u32[144,128]{1,0:T(1,128)}', space=vmem, size = 0x12000, scoped, tag = 'internal scratch']
  %s0 = inlined_call_operand.hbm [shape: f32[16,128], index: 0, kind: input, shape index: {}]
  %s1 = inlined_call_operand.hbm [shape: bf16[128,128], index: 1, kind: input, shape index: {}]
  %s2 = inlined_call_operand.hbm [shape: bf16[128,128], index: 2, kind: input, shape index: {}]
  %s3 = inlined_call_operand.hbm [shape: bf16[128,128], index: 3, kind: input, shape index: {}]
  %s4 = inlined_call_operand.hbm [shape: f32[16,128], index: 4, kind: output, shape index: {}]
  %s5 = sld [smem:[#allocation0]]
  $region42: #{tpu_custom_call.1} parent=0
    _
  %s7 = ssub.s32 1, %s5
  %s8 = scalar_select 0, %s7, %s5
  $region1: #{tpu_custom_call.1} parent=0
    #allocation2 [shape = 'u8[8192]{0}', space=vmem, size = 0x2000, scoped, tag = 'input window, operand 0, single buffered']
    #allocation3 [shape = 's32[1]{0}', space=sflag, size = 0x4, scoped, tag = 'scoped memory for tpu_custom_call.1']
    #allocation4 [shape = 's32[1]{0}', space=sflag, size = 0x4, scoped, tag = 'scoped memory for tpu_custom_call.1']
    #allocation5 [shape = 'u8[32768]{0}', space=vmem, size = 0x8000, scoped, tag = 'input window, operand 1, single buffered']
    #allocation6 [shape = 's32[1]{0}', space=sflag, size = 0x4, scoped, tag = 'scoped memory for tpu_custom_call.1']
    #allocation7 [shape = 'u8[32768]{0}', space=vmem, size = 0x8000, scoped, tag = 'input window, operand 2, single buffered']
    #allocation8 [shape = 'u8[32768]{0}', space=vmem, size = 0x8000, scoped, tag = 'input window, operand 3, single buffered']
    #allocation9 [shape = 's32[1]{0}', space=sflag, size = 0x4, scoped, tag = 'scoped memory for tpu_custom_call.1']
    #allocation10 [shape = 'u8[8192]{0}', space=vmem, size = 0x2000, scoped, tag = 'output window, operand 0, single buffered']
    %9 = vsyncpa [#allocation3], 0
    %10 = vsyncpa [#allocation6], 0
    %11 = vsyncpa [#allocation9], 0
    %12 = vsyncpa [#allocation4], 0
    // Predicated region
    $region2: #{tpu_custom_call.1} parent=1 // pred_check
      _
    $region3: #{tpu_custom_call.1} parent=1 // pred_check_branch
      %14 = sbr.rel (0) target = $region5
    $region4: #{tpu_custom_call.1} parent=1 // pred_region
      %s16 = ssub.s32 256, 256
      %17 = vsyncadd [#allocation3], %s16
      %s18 = sshll.u32 [#allocation2], 4
      %s19 = int_to_ptr.vmem [resolvable:$true] %s18
      %24 = dma.hbm_to_vmem [thread:$0]  %s0, 256, %s19, [#allocation3], 128, 128, 8
    $region5: #{tpu_custom_call.1} parent=1 // pred_fallthru
      _
    // Predicated region
    $region6: #{tpu_custom_call.1} parent=1 // pred_check
      _
    $region7: #{tpu_custom_call.1} parent=1 // pred_check_branch
      %26 = sbr.rel (0) target = $region9
    $region8: #{tpu_custom_call.1} parent=1 // pred_region
      %s28 = ssub.s32 1024, 1024
      %29 = vsyncadd [#allocation6], %s28
      %s30 = sshll.u32 [#allocation5], 4
      %s31 = int_to_ptr.vmem [resolvable:$true] %s30
      %36 = dma.hbm_to_vmem [thread:$0]  %s1, 1024, %s31, [#allocation6], 64, 64, 4
    $region9: #{tpu_custom_call.1} parent=1 // pred_fallthru
      _
    // Predicated region
    $region10: #{tpu_custom_call.1} parent=1 // pred_check
      _
    $region11: #{tpu_custom_call.1} parent=1 // pred_check_branch
      %38 = sbr.rel (0) target = $region13
    $region12: #{tpu_custom_call.1} parent=1 // pred_region
      %s40 = ssub.s32 1024, 1024
      %41 = vsyncadd [#allocation6], %s40
      %s42 = sshll.u32 [#allocation7], 4
      %s43 = int_to_ptr.vmem [resolvable:$true] %s42
      %48 = dma.hbm_to_vmem [thread:$0]  %s2, 1024, %s43, [#allocation6], 64, 64, 4
    $region13: #{tpu_custom_call.1} parent=1 // pred_fallthru
      _
    // Predicated region
    $region14: #{tpu_custom_call.1} parent=1 // pred_check
      _
    $region15: #{tpu_custom_call.1} parent=1 // pred_check_branch
      %50 = sbr.rel (0) target = $region17
    $region16: #{tpu_custom_call.1} parent=1 // pred_region
      %s52 = ssub.s32 1024, 1024
      %53 = vsyncadd [#allocation9], %s52
      %s54 = sshll.u32 [#allocation8], 4
      %s55 = int_to_ptr.vmem [resolvable:$true] %s54
      %60 = dma.hbm_to_vmem [thread:$0]  %s3, 1024, %s55, [#allocation9], 64, 64, 4
    $region17: #{tpu_custom_call.1} parent=1 // pred_fallthru
      _
    // Predicated region
    $region18: #{tpu_custom_call.1} parent=1 // pred_check
      _
    $region19: #{tpu_custom_call.1} parent=1 // pred_check_branch
      %62 = sbr.rel (0) target = $region21
    $region20: #{tpu_custom_call.1} parent=1 // pred_region
      %63 = dma.done [#allocation3], 256
    $region21: #{tpu_custom_call.1} parent=1 // pred_fallthru
      _
    // Predicated region
    $region22: #{tpu_custom_call.1} parent=1 // pred_check
      _
    $region23: #{tpu_custom_call.1} parent=1 // pred_check_branch
      %65 = sbr.rel (0) target = $region25
    $region24: #{tpu_custom_call.1} parent=1 // pred_region
      %66 = dma.done [#allocation6], 1024
    $region25: #{tpu_custom_call.1} parent=1 // pred_fallthru
      _
    // Predicated region
    $region26: #{tpu_custom_call.1} parent=1 // pred_check
      _
    $region27: #{tpu_custom_call.1} parent=1 // pred_check_branch
      %68 = sbr.rel (0) target = $region29
    $region28: #{tpu_custom_call.1} parent=1 // pred_region
      %69 = dma.done [#allocation6], 1024
    $region29: #{tpu_custom_call.1} parent=1 // pred_fallthru
      _
    // Predicated region
    $region30: #{tpu_custom_call.1} parent=1 // pred_check
      _
    $region31: #{tpu_custom_call.1} parent=1 // pred_check_branch
      %71 = sbr.rel (0) target = $region33
    $region32: #{tpu_custom_call.1} parent=1 // pred_region
      %72 = dma.done [#allocation9], 1024
    $region33: #{tpu_custom_call.1} parent=1 // pred_fallthru
      _
    %v74 = vld [vmem:[#allocation2] sm:$0xff]
    %v75 = vld [vmem:[#allocation2 + $0x8] sm:$0xff]
    %v76 = vpack.c.bf16 %v75, %v74
    %v77 = vld [vmem:[#allocation7] sm:$0xf]
    %v78 = vld [vmem:[#allocation7 + $0x4] sm:$0xf]
    %v79 = vld [vmem:[#allocation7 + $0x8] sm:$0xf]
    %v80 = vld [vmem:[#allocation7 + $0xc] sm:$0xf]
    %v81 = vld [vmem:[#allocation7 + $0x10] sm:$0xf]
    %v82 = vld [vmem:[#allocation7 + $0x14] sm:$0xf]
    %v83 = vld [vmem:[#allocation7 + $0x18] sm:$0xf]
    %v84 = vld [vmem:[#allocation7 + $0x1c] sm:$0xf]
    %v85 = vld [vmem:[#allocation7 + $0x20] sm:$0xf]
    %v86 = vld [vmem:[#allocation7 + $0x24] sm:$0xf]
    %v87 = vld [vmem:[#allocation7 + $0x28] sm:$0xf]
    %v88 = vld [vmem:[#allocation7 + $0x2c] sm:$0xf]
    %v89 = vld [vmem:[#allocation7 + $0x30] sm:$0xf]
    %v90 = vld [vmem:[#allocation7 + $0x34] sm:$0xf]
    %v91 = vld [vmem:[#allocation7 + $0x38] sm:$0xf]
    %v92 = vld [vmem:[#allocation7 + $0x3c] sm:$0xf]
    %v109 = vunpack.c.l.b16 %v77
    %v110 = vunpack.c.l.b16 %v78
    %v111 = vunpack.c.l.b16 %v79
    %v112 = vunpack.c.l.b16 %v80
    %v113 = vunpack.c.l.b16 %v81
    %v114 = vunpack.c.l.b16 %v82
    %v115 = vunpack.c.l.b16 %v83
    %v116 = vunpack.c.l.b16 %v84
    %v117 = vunpack.c.l.b16 %v85
    %v118 = vunpack.c.l.b16 %v86
    %v119 = vunpack.c.l.b16 %v87
    %v120 = vunpack.c.l.b16 %v88
    %v121 = vunpack.c.l.b16 %v89
    %v122 = vunpack.c.l.b16 %v90
    %v123 = vunpack.c.l.b16 %v91
    %v124 = vunpack.c.l.b16 %v92
    %v125 = vpack.c.b16 %v110, %v109
    %v126 = vpack.c.b16 %v112, %v111
    %v127 = vpack.c.b16 %v114, %v113
    %v128 = vpack.c.b16 %v116, %v115
    %v129 = vpack.c.b16 %v118, %v117
    %v130 = vpack.c.b16 %v120, %v119
    %v131 = vpack.c.b16 %v122, %v121
    %v132 = vpack.c.b16 %v124, %v123
    %141 = vmatprep.subr.bf16.mxu0 0
    %142 = vmatpush1.bf16.msra.mxu0 %v132
    %143 = vmatprep.subr.bf16.mxu0 0
    %144 = vmatpush1.bf16.msra.mxu0 %v131
    %145 = vmatprep.subr.bf16.mxu0 0
    %146 = vmatpush1.bf16.msra.mxu0 %v130
    %147 = vmatprep.subr.bf16.mxu0 0
    %148 = vmatpush1.bf16.msra.mxu0 %v129
    %149 = vmatprep.subr.bf16.mxu0 0
    %150 = vmatpush1.bf16.msra.mxu0 %v128
    %151 = vmatprep.subr.bf16.mxu0 0
    %152 = vmatpush1.bf16.msra.mxu0 %v127
    %153 = vmatprep.subr.bf16.mxu0 0
    %154 = vmatpush1.bf16.msra.mxu0 %v126
    %155 = vmatprep.subr.bf16.mxu0 0
    %156 = vmatpush1.bf16.msra.mxu0 %v125
    %157 = vmatprep.subr.bf16.mxu0 0
    %158 = vmatpush2.bf16.msra.mxu0 0
    %159 = vmatprep.subr.bf16.mxu0 0
    %160 = vmatpush2.bf16.msra.mxu0 0
    %161 = vmatprep.subr.bf16.mxu0 0
    %162 = vmatpush2.bf16.msra.mxu0 0
    %163 = vmatprep.subr.bf16.mxu0 0
    %164 = vmatpush2.bf16.msra.mxu0 0
    %165 = vmatprep.subr.bf16.mxu0 0
    %166 = vmatpush2.bf16.msra.mxu0 0
    %167 = vmatprep.subr.bf16.mxu0 0
    %168 = vmatpush2.bf16.msra.mxu0 0
    %169 = vmatprep.subr.bf16.mxu0 0
    %170 = vmatpush2.bf16.msra.mxu0 0
    %171 = vmatprep.subr.bf16.mxu0 0
    %172 = vmatpush2.bf16.msra.mxu0 0
    %173 = vmatprep.mubr.bf16.mxu0 0
    %174 = vmatmul.mubr.bf16.gmra.mxu0 %v76
    %v175 = vpop.f32.mrf.mxu0
    %v176 = vadd.f32 0.0, %v175
    %v177 = vpop.f32.mrf.mxu0
    %v178 = vpop.f32.mrf.mxu0
    %v179 = vadd.f32 0.0, %v178
    %v180 = vpop.f32.mrf.mxu0
    %181 = vdwg.mxu0
    %v182 = vmul.f32 %v176, 0.5
    %v183 = vmul.f32 %v179, 0.5
    %v184 = vmul.f32 %v176, %v176
    %v185 = vmul.f32 %v179, %v179
    %v186 = vmul.f32 %v184, %v176
    %v187 = vmul.f32 %v185, %v179
    %v188 = vmul.f32 %v186, 0.044715
    %v189 = vmul.f32 %v187, 0.044715
    %v190 = vadd.f32 %v176, %v188
    %v191 = vadd.f32 %v179, %v189
    %v192 = vmul.f32 %v190, 0.7978846
    %v193 = vmul.f32 %v191, 0.7978846
    %v194 = vtanh.pop %v192
    %v195 = vtanh.pop %v193
    %v196 = vadd.f32 %v194, 1.0
    %v197 = vadd.f32 %v195, 1.0
    %v198 = vmul.f32 %v182, %v196
    %v199 = vmul.f32 %v183, %v197
    %v200 = vld [vmem:[#allocation5] sm:$0xf]
    %v201 = vld [vmem:[#allocation5 + $0x4] sm:$0xf]
    %v202 = vld [vmem:[#allocation5 + $0x8] sm:$0xf]
    %v203 = vld [vmem:[#allocation5 + $0xc] sm:$0xf]
    %v204 = vld [vmem:[#allocation5 + $0x10] sm:$0xf]
    %v205 = vld [vmem:[#allocation5 + $0x14] sm:$0xf]
    %v206 = vld [vmem:[#allocation5 + $0x18] sm:$0xf]
    %v207 = vld [vmem:[#allocation5 + $0x1c] sm:$0xf]
    %v208 = vld [vmem:[#allocation5 + $0x20] sm:$0xf]
    %v209 = vld [vmem:[#allocation5 + $0x24] sm:$0xf]
    %v210 = vld [vmem:[#allocation5 + $0x28] sm:$0xf]
    %v211 = vld [vmem:[#allocation5 + $0x2c] sm:$0xf]
    %v212 = vld [vmem:[#allocation5 + $0x30] sm:$0xf]
    %v213 = vld [vmem:[#allocation5 + $0x34] sm:$0xf]
    %v214 = vld [vmem:[#allocation5 + $0x38] sm:$0xf]
    %v215 = vld [vmem:[#allocation5 + $0x3c] sm:$0xf]
    %v232 = vunpack.c.l.b16 %v200
    %v233 = vunpack.c.l.b16 %v201
    %v234 = vunpack.c.l.b16 %v202
    %v235 = vunpack.c.l.b16 %v203
    %v236 = vunpack.c.l.b16 %v204
    %v237 = vunpack.c.l.b16 %v205
    %v238 = vunpack.c.l.b16 %v206
    %v239 = vunpack.c.l.b16 %v207
    %v240 = vunpack.c.l.b16 %v208
    %v241 = vunpack.c.l.b16 %v209
    %v242 = vunpack.c.l.b16 %v210
    %v243 = vunpack.c.l.b16 %v211
    %v244 = vunpack.c.l.b16 %v212
    %v245 = vunpack.c.l.b16 %v213
    %v246 = vunpack.c.l.b16 %v214
    %v247 = vunpack.c.l.b16 %v215
    %v248 = vpack.c.b16 %v233, %v232
    %v249 = vpack.c.b16 %v235, %v234
    %v250 = vpack.c.b16 %v237, %v236
    %v251 = vpack.c.b16 %v239, %v238
    %v252 = vpack.c.b16 %v241, %v240
    %v253 = vpack.c.b16 %v243, %v242
    %v254 = vpack.c.b16 %v245, %v244
    %v255 = vpack.c.b16 %v247, %v246
    %264 = vmatprep.subr.bf16.mxu0 0
    %265 = vmatpush1.bf16.msra.mxu0 %v255
    %266 = vmatprep.subr.bf16.mxu0 0
    %267 = vmatpush1.bf16.msra.mxu0 %v254
    %268 = vmatprep.subr.bf16.mxu0 0
    %269 = vmatpush1.bf16.msra.mxu0 %v253
    %270 = vmatprep.subr.bf16.mxu0 0
    %271 = vmatpush1.bf16.msra.mxu0 %v252
    %272 = vmatprep.subr.bf16.mxu0 0
    %273 = vmatpush1.bf16.msra.mxu0 %v251
    %274 = vmatprep.subr.bf16.mxu0 0
    %275 = vmatpush1.bf16.msra.mxu0 %v250
    %276 = vmatprep.subr.bf16.mxu0 0
    %277 = vmatpush1.bf16.msra.mxu0 %v249
    %278 = vmatprep.subr.bf16.mxu0 0
    %279 = vmatpush1.bf16.msra.mxu0 %v248
    %280 = vmatprep.subr.bf16.mxu0 0
    %281 = vmatpush2.bf16.msra.mxu0 0
    %282 = vmatprep.subr.bf16.mxu0 0
    %283 = vmatpush2.bf16.msra.mxu0 0
    %284 = vmatprep.subr.bf16.mxu0 0
    %285 = vmatpush2.bf16.msra.mxu0 0
    %286 = vmatprep.subr.bf16.mxu0 0
    %287 = vmatpush2.bf16.msra.mxu0 0
    %288 = vmatprep.subr.bf16.mxu0 0
    %289 = vmatpush2.bf16.msra.mxu0 0
    %290 = vmatprep.subr.bf16.mxu0 0
    %291 = vmatpush2.bf16.msra.mxu0 0
    %292 = vmatprep.subr.bf16.mxu0 0
    %293 = vmatpush2.bf16.msra.mxu0 0
    %294 = vmatprep.subr.bf16.mxu0 0
    %295 = vmatpush2.bf16.msra.mxu0 0
    %296 = vmatprep.mubr.bf16.mxu0 0
    %297 = vmatmul.mubr.bf16.gmra.mxu0 %v76
    %v298 = vpop.f32.mrf.mxu0
    %v299 = vadd.f32 0.0, %v298
    %v300 = vpop.f32.mrf.mxu0
    %v301 = vpop.f32.mrf.mxu0
    %v302 = vadd.f32 0.0, %v301
    %v303 = vpop.f32.mrf.mxu0
    %304 = vdwg.mxu0
    %v305 = vmul.f32 %v299, %v198
    %v306 = vmul.f32 %v302, %v199
    %v307 = vpack.c.bf16 %v306, %v305
    %v308 = vld [vmem:[#allocation8] sm:$0xf]
    %v309 = vld [vmem:[#allocation8 + $0x4] sm:$0xf]
    %v310 = vld [vmem:[#allocation8 + $0x8] sm:$0xf]
    %v311 = vld [vmem:[#allocation8 + $0xc] sm:$0xf]
    %v312 = vld [vmem:[#allocation8 + $0x10] sm:$0xf]
    %v313 = vld [vmem:[#allocation8 + $0x14] sm:$0xf]
    %v314 = vld [vmem:[#allocation8 + $0x18] sm:$0xf]
    %v315 = vld [vmem:[#allocation8 + $0x1c] sm:$0xf]
    %v316 = vld [vmem:[#allocation8 + $0x20] sm:$0xf]
    %v317 = vld [vmem:[#allocation8 + $0x24] sm:$0xf]
    %v318 = vld [vmem:[#allocation8 + $0x28] sm:$0xf]
    %v319 = vld [vmem:[#allocation8 + $0x2c] sm:$0xf]
    %v320 = vld [vmem:[#allocation8 + $0x30] sm:$0xf]
    %v321 = vld [vmem:[#allocation8 + $0x34] sm:$0xf]
    %v322 = vld [vmem:[#allocation8 + $0x38] sm:$0xf]
    %v323 = vld [vmem:[#allocation8 + $0x3c] sm:$0xf]
    %v340 = vunpack.c.l.b16 %v308
    %v341 = vunpack.c.l.b16 %v309
    %v342 = vunpack.c.l.b16 %v310
    %v343 = vunpack.c.l.b16 %v311
    %v344 = vunpack.c.l.b16 %v312
    %v345 = vunpack.c.l.b16 %v313
    %v346 = vunpack.c.l.b16 %v314
    %v347 = vunpack.c.l.b16 %v315
    %v348 = vunpack.c.l.b16 %v316
    %v349 = vunpack.c.l.b16 %v317
    %v350 = vunpack.c.l.b16 %v318
    %v351 = vunpack.c.l.b16 %v319
    %v352 = vunpack.c.l.b16 %v320
    %v353 = vunpack.c.l.b16 %v321
    %v354 = vunpack.c.l.b16 %v322
    %v355 = vunpack.c.l.b16 %v323
    %v356 = vpack.c.b16 %v341, %v340
    %v357 = vpack.c.b16 %v343, %v342
    %v358 = vpack.c.b16 %v345, %v344
    %v359 = vpack.c.b16 %v347, %v346
    %v360 = vpack.c.b16 %v349, %v348
    %v361 = vpack.c.b16 %v351, %v350
    %v362 = vpack.c.b16 %v353, %v352
    %v363 = vpack.c.b16 %v355, %v354
    %372 = vmatprep.subr.bf16.mxu0 0
    %373 = vmatpush1.bf16.msra.mxu0 %v363
    %374 = vmatprep.subr.bf16.mxu0 0
    %375 = vmatpush1.bf16.msra.mxu0 %v362
    %376 = vmatprep.subr.bf16.mxu0 0
    %377 = vmatpush1.bf16.msra.mxu0 %v361
    %378 = vmatprep.subr.bf16.mxu0 0
    %379 = vmatpush1.bf16.msra.mxu0 %v360
    %380 = vmatprep.subr.bf16.mxu0 0
    %381 = vmatpush1.bf16.msra.mxu0 %v359
    %382 = vmatprep.subr.bf16.mxu0 0
    %383 = vmatpush1.bf16.msra.mxu0 %v358
    %384 = vmatprep.subr.bf16.mxu0 0
    %385 = vmatpush1.bf16.msra.mxu0 %v357
    %386 = vmatprep.subr.bf16.mxu0 0
    %387 = vmatpush1.bf16.msra.mxu0 %v356
    %388 = vmatprep.subr.bf16.mxu0 0
    %389 = vmatpush2.bf16.msra.mxu0 0
    %390 = vmatprep.subr.bf16.mxu0 0
    %391 = vmatpush2.bf16.msra.mxu0 0
    %392 = vmatprep.subr.bf16.mxu0 0
    %393 = vmatpush2.bf16.msra.mxu0 0
    %394 = vmatprep.subr.bf16.mxu0 0
    %395 = vmatpush2.bf16.msra.mxu0 0
    %396 = vmatprep.subr.bf16.mxu0 0
    %397 = vmatpush2.bf16.msra.mxu0 0
    %398 = vmatprep.subr.bf16.mxu0 0
    %399 = vmatpush2.bf16.msra.mxu0 0
    %400 = vmatprep.subr.bf16.mxu0 0
    %401 = vmatpush2.bf16.msra.mxu0 0
    %402 = vmatprep.subr.bf16.mxu0 0
    %403 = vmatpush2.bf16.msra.mxu0 0
    %404 = vmatprep.mubr.bf16.mxu0 0
    %405 = vmatmul.mubr.bf16.gmra.mxu0 %v307
    %v406 = vpop.f32.mrf.mxu0
    %v407 = vadd.f32 0.0, %v406
    %v408 = vpop.f32.mrf.mxu0
    %v409 = vpop.f32.mrf.mxu0
    %v410 = vadd.f32 0.0, %v409
    %v411 = vpop.f32.mrf.mxu0
    %412 = vdwg.mxu0
    %413 = vst [vmem:[#allocation10] sm:$0xff] %v407
    %414 = vst [vmem:[#allocation10 + $0x8] sm:$0xff] %v410
    // Predicated region
    $region34: #{tpu_custom_call.1} parent=1 // pred_check
      _
    $region35: #{tpu_custom_call.1} parent=1 // pred_check_branch
      %416 = sbr.rel (0) target = $region37
    $region36: #{tpu_custom_call.1} parent=1 // pred_region
      %s418 = ssub.s32 256, 256
      %419 = vsyncadd [#allocation4], %s418
      %s420 = sshll.u32 [#allocation10], 4
      %s421 = int_to_ptr.vmem [resolvable:$true] %s420
      %426 = dma.vmem_to_hbm [thread:$0]  %s421, 256, %s4, [#allocation4], 128, 128, 8
    $region37: #{tpu_custom_call.1} parent=1 // pred_fallthru
      _
    // Predicated region
    $region38: #{tpu_custom_call.1} parent=1 // pred_check
      _
    $region39: #{tpu_custom_call.1} parent=1 // pred_check_branch
      %428 = sbr.rel (0) target = $region41
    $region40: #{tpu_custom_call.1} parent=1 // pred_region
      %429 = dma.done [#allocation4], 256
    $region41: #{tpu_custom_call.1} parent=1 // pred_fallthru
      _
    %430 = vsyncpa [#allocation3], 1
    %431 = vsyncpa [#allocation6], 1
    %432 = vsyncpa [#allocation9], 1
    %433 = vsyncpa [#allocation4], 1

</llo_original>
